<compile_context>
chip_gen: v5e
topology: v5e:2x2
jax: 0.10.0
libtpu: 0.0.40
codegen_flags: <defaults>
</compile_context>

<pallas_src>
import functools
import math

import jax
import jax.numpy as jnp
from jax import lax
from jax.experimental import pallas as pl
from jax.experimental.pallas import tpu as pltpu


def _attn_body(q_ref, w_ref, v_ref, m_ref, pooled_ref, attn_ref):
    # q_ref:      (1, 1, Q)  VMEM
    # w_ref:      (Q, V)     VMEM (resident across the batch grid)
    # v_ref:      (1, S, V)  VMEM
    # m_ref:      (1, 1, S)  VMEM or None (statically specialized)
    # pooled_ref: (1, 1, V)  VMEM
    # attn_ref:   (1, 1, S)  VMEM
    q = q_ref[0].astype(jnp.float32)        # (1, Q)
    w = w_ref[...].astype(jnp.float32)      # (Q, V)
    v = v_ref[0]                            # (S, V)

    # query @ W  -> (1, V); identical to (value @ W^T) @ query after reorder.
    qproj = jnp.dot(q, w, preferred_element_type=jnp.float32)

    # scores[s] = <value[s, :], qproj>  -> (1, S), lane-major over S (MXU).
    scores = lax.dot_general(
        qproj, v.astype(jnp.float32),
        dimension_numbers=(((1,), (1,)), ((), ())),
        preferred_element_type=jnp.float32)

    # softmax over the sequence axis.
    m = jnp.max(scores, axis=-1, keepdims=True)
    e = jnp.exp(scores - m)
    attn = e / jnp.sum(e, axis=-1, keepdims=True)

    if m_ref is not None:
        attn = attn * m_ref[0].astype(jnp.float32)
        attn = attn / jnp.sum(attn, axis=-1, keepdims=True)

    # pooled = attn @ value -> (1, V)
    pooled = jnp.dot(attn, v.astype(jnp.float32),
                     preferred_element_type=jnp.float32)

    pooled_ref[0] = pooled.astype(pooled_ref.dtype)
    attn_ref[0] = attn.astype(attn_ref.dtype)


def _make_kernel(has_mask: bool):
    if has_mask:
        def kernel(q_ref, w_ref, v_ref, m_ref, pooled_ref, attn_ref):
            _attn_body(q_ref, w_ref, v_ref, m_ref, pooled_ref, attn_ref)
    else:
        def kernel(q_ref, w_ref, v_ref, pooled_ref, attn_ref):
            _attn_body(q_ref, w_ref, v_ref, None, pooled_ref, attn_ref)
    return kernel


@jax.jit
def bilinear_attention(query, value, weight, node_mask=None):
    """query: (B, Q); value: (B, S, V); weight: (Q, V) = nn.Linear(V, Q).weight.

    Returns (pooled (B, V), attn (B, S)) — same as the PyTorch module.
    """
    B, Q = query.shape
    Bv, S, V = value.shape
    assert Bv == B and weight.shape == (Q, V)

    has_mask = node_mask is not None
    q3 = query.reshape(B, 1, Q)

    in_specs = [
        pl.BlockSpec((1, 1, Q), lambda b: (b, 0, 0)),   # query row
        pl.BlockSpec((Q, V), lambda b: (0, 0)),         # weight: VMEM-resident
        pl.BlockSpec((1, S, V), lambda b: (b, 0, 0)),   # value slab
    ]
    args = [q3, weight, value]
    if has_mask:
        in_specs.append(pl.BlockSpec((1, 1, S), lambda b: (b, 0, 0)))
        args.append(node_mask.reshape(B, 1, S).astype(value.dtype))

    out_shapes = (
        jax.ShapeDtypeStruct((B, 1, V), value.dtype),   # pooled
        jax.ShapeDtypeStruct((B, 1, S), value.dtype),   # attn
    )
    out_specs = (
        pl.BlockSpec((1, 1, V), lambda b: (b, 0, 0)),
        pl.BlockSpec((1, 1, S), lambda b: (b, 0, 0)),
    )

    pooled3, attn3 = pl.pallas_call(
        _make_kernel(has_mask),
        out_shape=out_shapes,
        grid_spec=pltpu.PrefetchScalarGridSpec(
            num_scalar_prefetch=0,
            grid=(B,),
            in_specs=in_specs,
            out_specs=out_specs,
        ),
        compiler_params=pltpu.CompilerParams(
            dimension_semantics=("parallel",),   # batches independent -> megacore on v7x
        ),
    )(*args)

    return pooled3.reshape(B, V), attn3.reshape(B, S)


def _reference(query, value, weight, node_mask=None):
    # Exact PyTorch-order reference in pure JAX.
    lin = jnp.einsum("bsv,qv->bsq", value, weight)          # self.linear(value)
    scores = jnp.einsum("bsq,bq->bs", lin, query)           # .bmm(query.unsqueeze(-1))
    attn = jax.nn.softmax(scores, axis=1)                   # Softmax(1)
    if node_mask is not None:
        attn = attn * node_mask
        attn = attn / jnp.sum(attn, axis=1, keepdims=True)
    pooled = jnp.einsum("bs,bsv->bv", attn, value)
    return pooled, attn


if __name__ == "__main__":
    # Small deterministic shapes (lane-friendly: V multiple of 128).
    B, S, Q, V = 4, 16, 64, 128

    key = jax.random.PRNGKey(0)
    kq, kv, kw, km = jax.random.split(key, 4)

    query = jax.random.normal(kq, (B, Q), dtype=jnp.float32)
    value = jax.random.normal(kv, (B, S, V), dtype=jnp.float32)
    # nn.Linear(V, Q, bias=False).weight ~ U(-1/sqrt(V), 1/sqrt(V)), shape (Q, V)
    weight = jax.random.uniform(
        kw, (Q, V), dtype=jnp.float32, minval=-1.0, maxval=1.0) / math.sqrt(V)
    node_mask = (jax.random.uniform(km, (B, S)) > 0.3).astype(jnp.float32)
    node_mask = node_mask.at[:, 0].set(1.0)  # keep every row non-empty (avoid 0/0)

    # Masked path.
    pooled, attn = bilinear_attention(query, value, weight, node_mask)
    pooled = jax.block_until_ready(pooled)
    attn = jax.block_until_ready(attn)
    ref_pooled, ref_attn = _reference(query, value, weight, node_mask)
    assert pooled.shape == (B, V) and attn.shape == (B, S)
    assert jnp.allclose(attn, ref_attn, atol=1e-3, rtol=1e-3), "attn mismatch"
    assert jnp.allclose(pooled, ref_pooled, atol=1e-3, rtol=1e-3), "pooled mismatch"

    # Unmasked path (specialized kernel: no mask operand at all).
    pooled2, attn2 = bilinear_attention(query, value, weight)
    pooled2 = jax.block_until_ready(pooled2)
    ref_pooled2, ref_attn2 = _reference(query, value, weight)
    assert jnp.allclose(attn2, ref_attn2, atol=1e-3, rtol=1e-3), "attn (no mask) mismatch"
    assert jnp.allclose(pooled2, ref_pooled2, atol=1e-3, rtol=1e-3), "pooled (no mask) mismatch"

    print("KERNEL_OK")
</pallas_src>

<mosaic_0001>
module attributes {stable_mosaic.version = 11 : i64} {
  func.func @kernel(%arg0: i32, %arg1: memref<1x1x64xf32, #tpu.memory_space<vmem>>, %arg2: memref<64x128xf32, #tpu.memory_space<vmem>>, %arg3: memref<1x16x128xf32, #tpu.memory_space<vmem>>, %arg4: memref<1x1x16xf32, #tpu.memory_space<vmem>>, %arg5: memref<1x1x128xf32, #tpu.memory_space<vmem>>, %arg6: memref<1x1x16xf32, #tpu.memory_space<vmem>>) attributes {dimension_semantics = [#tpu.dimension_semantics<parallel>], iteration_bounds = array<i64: 4>, scalar_prefetch = 0 : i64, scratch_operands = 0 : i64, tpu.core_type = #tpu.core_type<tc>, window_params = [{transform_indices = @transform_0, window_bounds = array<i64: 1, 1, 64>}, {pipeline_mode = #tpu.pipeline_mode<synchronous>, transform_indices = @transform_1, window_bounds = array<i64: 64, 128>}, {transform_indices = @transform_2, window_bounds = array<i64: 1, 16, 128>}, {transform_indices = @transform_3, window_bounds = array<i64: 1, 1, 16>}, {transform_indices = @transform_4, window_bounds = array<i64: 1, 1, 128>}, {transform_indices = @transform_5, window_bounds = array<i64: 1, 1, 16>}]} {
    %c0 = arith.constant 0 : index
    %c0_0 = arith.constant 0 : index
    %c0_1 = arith.constant 0 : index
    %0 = vector.load %arg1[%c0, %c0_0, %c0_1] : memref<1x1x64xf32, #tpu.memory_space<vmem>>, vector<1x1x64xf32>
    %1 = vector.shape_cast %0 : vector<1x1x64xf32> to vector<1x64xf32>
    %c0_2 = arith.constant 0 : index
    %c0_3 = arith.constant 0 : index
    %2 = vector.load %arg2[%c0_2, %c0_3] : memref<64x128xf32, #tpu.memory_space<vmem>>, vector<64x128xf32>
    %c0_4 = arith.constant 0 : index
    %c0_5 = arith.constant 0 : index
    %c0_6 = arith.constant 0 : index
    %3 = vector.load %arg3[%c0_4, %c0_5, %c0_6] : memref<1x16x128xf32, #tpu.memory_space<vmem>>, vector<1x16x128xf32>
    %4 = vector.shape_cast %3 : vector<1x16x128xf32> to vector<16x128xf32>
    %cst = arith.constant dense<0.000000e+00> : vector<1x128xf32>
    %5 = tpu.matmul %1, %2, %cst {dimension_numbers = #tpu.dot_dimension_numbers<[1], [0], [0], [1], [0, 0, 1, 1], [], []>} : vector<1x64xf32>, vector<64x128xf32>, vector<1x128xf32> -> vector<1x128xf32>
    %cst_7 = arith.constant dense<0.000000e+00> : vector<1x16xf32>
    %6 = tpu.matmul %5, %4, %cst_7 {dimension_numbers = #tpu.dot_dimension_numbers<[1], [1], [0], [0], [0, 0, 1, 0], [], []>} : vector<1x128xf32>, vector<16x128xf32>, vector<1x16xf32> -> vector<1x16xf32>
    %cst_8 = arith.constant dense<0xFF800000> : vector<1xf32>
    %7 = vector.multi_reduction <maximumf>, %6, %cst_8 [1] : vector<1x16xf32> to vector<1xf32>
    %8 = vector.shape_cast %7 : vector<1xf32> to vector<1x1xf32>
    %9 = vector.broadcast %8 : vector<1x1xf32> to vector<1x16xf32>
    %10 = arith.subf %6, %9 : vector<1x16xf32>
    %11 = math.exp %10 : vector<1x16xf32>
    %cst_9 = arith.constant dense<0.000000e+00> : vector<1xf32>
    %12 = vector.multi_reduction <add>, %11, %cst_9 [1] : vector<1x16xf32> to vector<1xf32>
    %13 = vector.shape_cast %12 : vector<1xf32> to vector<1x1xf32>
    %14 = vector.broadcast %13 : vector<1x1xf32> to vector<1x16xf32>
    %15 = arith.divf %11, %14 : vector<1x16xf32>
    %c0_10 = arith.constant 0 : index
    %c0_11 = arith.constant 0 : index
    %c0_12 = arith.constant 0 : index
    %16 = vector.load %arg4[%c0_10, %c0_11, %c0_12] : memref<1x1x16xf32, #tpu.memory_space<vmem>>, vector<1x1x16xf32>
    %17 = vector.shape_cast %16 : vector<1x1x16xf32> to vector<1x16xf32>
    %18 = arith.mulf %15, %17 : vector<1x16xf32>
    %cst_13 = arith.constant dense<0.000000e+00> : vector<1xf32>
    %19 = vector.multi_reduction <add>, %18, %cst_13 [1] : vector<1x16xf32> to vector<1xf32>
    %20 = vector.shape_cast %19 : vector<1xf32> to vector<1x1xf32>
    %21 = vector.broadcast %20 : vector<1x1xf32> to vector<1x16xf32>
    %22 = arith.divf %18, %21 : vector<1x16xf32>
    %cst_14 = arith.constant dense<0.000000e+00> : vector<1x128xf32>
    %23 = tpu.matmul %22, %4, %cst_14 {dimension_numbers = #tpu.dot_dimension_numbers<[1], [0], [0], [1], [0, 0, 1, 1], [], []>} : vector<1x16xf32>, vector<16x128xf32>, vector<1x128xf32> -> vector<1x128xf32>
    %c0_15 = arith.constant 0 : index
    %c0_16 = arith.constant 0 : index
    %c0_17 = arith.constant 0 : index
    %24 = vector.load %arg5[%c0_15, %c0_16, %c0_17] : memref<1x1x128xf32, #tpu.memory_space<vmem>>, vector<1x1x128xf32>
    %25 = vector.shape_cast %24 : vector<1x1x128xf32> to vector<1x128xf32>
    %26 = vector.shape_cast %23 : vector<1x128xf32> to vector<1x1x128xf32>
    tpu.vector_store %arg5[%c0_15, %c0_16, %c0_17], %26 {strides = array<i32>} : memref<1x1x128xf32, #tpu.memory_space<vmem>>, vector<1x1x128xf32>,
    %c0_18 = arith.constant 0 : index
    %c0_19 = arith.constant 0 : index
    %c0_20 = arith.constant 0 : index
    %27 = vector.load %arg6[%c0_18, %c0_19, %c0_20] : memref<1x1x16xf32, #tpu.memory_space<vmem>>, vector<1x1x16xf32>
    %28 = vector.shape_cast %27 : vector<1x1x16xf32> to vector<1x16xf32>
    %29 = vector.shape_cast %22 : vector<1x16xf32> to vector<1x1x16xf32>
    tpu.vector_store %arg6[%c0_18, %c0_19, %c0_20], %29 {strides = array<i32>} : memref<1x1x16xf32, #tpu.memory_space<vmem>>, vector<1x1x16xf32>,
    return
  }
  func.func @transform_0(%arg0: i32) -> (i32, i32, i32) {
    %c0_i32 = arith.constant 0 : i32
    %c0_i32_0 = arith.constant 0 : i32
    %c0_i32_1 = arith.constant 0 : i32
    return %arg0, %c0_i32, %c0_i32_0 : i32, i32, i32
  }
  func.func @transform_1(%arg0: i32) -> (i32, i32) {
    %c0_i32 = arith.constant 0 : i32
    %c0_i32_0 = arith.constant 0 : i32
    %c0_i32_1 = arith.constant 0 : i32
    return %c0_i32, %c0_i32_0 : i32, i32
  }
  func.func @transform_2(%arg0: i32) -> (i32, i32, i32) {
    %c0_i32 = arith.constant 0 : i32
    %c0_i32_0 = arith.constant 0 : i32
    %c0_i32_1 = arith.constant 0 : i32
    return %arg0, %c0_i32, %c0_i32_0 : i32, i32, i32
  }
  func.func @transform_3(%arg0: i32) -> (i32, i32, i32) {
    %c0_i32 = arith.constant 0 : i32
    %c0_i32_0 = arith.constant 0 : i32
    %c0_i32_1 = arith.constant 0 : i32
    return %arg0, %c0_i32, %c0_i32_0 : i32, i32, i32
  }
  func.func @transform_4(%arg0: i32) -> (i32, i32, i32) {
    %c0_i32 = arith.constant 0 : i32
    %c0_i32_0 = arith.constant 0 : i32
    %c0_i32_1 = arith.constant 0 : i32
    return %arg0, %c0_i32, %c0_i32_0 : i32, i32, i32
  }
  func.func @transform_5(%arg0: i32) -> (i32, i32, i32) {
    %c0_i32 = arith.constant 0 : i32
    %c0_i32_0 = arith.constant 0 : i32
    %c0_i32_1 = arith.constant 0 : i32
    return %arg0, %c0_i32, %c0_i32_0 : i32, i32, i32
  }
}

</mosaic_0001>

<llo_original>
// kernel: bilinear_attention.1
$region0: #{bilinear_attention.1}
  #allocation0 [shape = 'u32[]', space=smem, size = 0x4, offset = 0x4, fixed_abs, tag = 'smem constant byte address 0x4 - core index']
  #allocation1 [shape = 'u32[72,128]{1,0:T(1,128)}', space=vmem, size = 0x9000, scoped, tag = 'internal scratch']
  %s0 = inlined_call_operand.hbm [shape: f32[4,1,64], index: 0, kind: input, shape index: {}]
  %s1 = inlined_call_operand.hbm [shape: f32[64,128], index: 1, kind: input, shape index: {}]
  %s2 = inlined_call_operand.hbm [shape: f32[4,16,128], index: 2, kind: input, shape index: {}]
  %s3 = inlined_call_operand.vmem [shape: f32[4,1,16], index: 3, kind: input, shape index: {}]
  %s4 = inlined_call_operand.hbm [shape: f32[4,1,128], index: 4, kind: output, shape index: {0}]
  %s5 = inlined_call_operand.hbm [shape: f32[4,1,16], index: 5, kind: output, shape index: {1}]
  %6 = xla_tuple %s4, %s5
  %s7 = sld [smem:[#allocation0]]
  $region69: #{bilinear_attention.1} parent=0
    _
  %s9 = ssub.s32 1, %s7
  %s10 = scalar_select 0, %s9, %s7
  $region1: #{bilinear_attention.1} parent=0
    #allocation2 [shape = 'u8[1024]{0}', space=vmem, size = 0x400, scoped, tag = 'input window, operand 0']
    #allocation3 [shape = 's32[2]{0}', space=sflag, size = 0x8, scoped, tag = 'scoped memory for bilinear_attention.1']
    #allocation4 [shape = 's32[2]{0}', space=sflag, size = 0x8, scoped, tag = 'scoped memory for bilinear_attention.1']
    #allocation5 [shape = 'u8[32768]{0}', space=vmem, size = 0x8000, scoped, tag = 'input window, operand 1, single buffered']
    #allocation6 [shape = 's32[1]{0}', space=sflag, size = 0x4, scoped, tag = 'scoped memory for bilinear_attention.1']
    #allocation7 [shape = 'u8[16384]{0}', space=vmem, size = 0x4000, scoped, tag = 'input window, operand 2']
    #allocation8 [shape = 'u8[1024]{0}', space=vmem, size = 0x400, scoped, tag = 'output window, operand 0']
    #allocation9 [shape = 'u8[1024]{0}', space=vmem, size = 0x400, scoped, tag = 'output window, operand 1']
    #allocation10 [shape = 's32[2]{0}', space=sflag, size = 0x8, scoped, tag = 'scoped memory for bilinear_attention.1']
    %11 = vsyncpa [#allocation3], 0
    %s12 = scalar_lea.sflag [#allocation3], 1
    %13 = vsyncpa %s12, 0
    %14 = vsyncpa [#allocation6], 0
    %15 = vsyncpa [#allocation4], 0
    %s16 = scalar_lea.sflag [#allocation4], 1
    %17 = vsyncpa %s16, 0
    %18 = vsyncpa [#allocation10], 0
    %s19 = scalar_lea.sflag [#allocation10], 1
    %20 = vsyncpa %s19, 0
    loop: start=0, step=1, limit=6
    $region2: #{bilinear_attention.1} parent=1 // loop_pre_header
      _
    $region3: #{bilinear_attention.1} parent=1 // loop_header
      %s22 = sphi 0, %s26
      %p23 = scmp.ge.s32.totalorder %s22, 6
      %s32 = sphi 0, %s34
      %s35 = sphi 0, %s32
      %s36 = sphi 0, %s35
      %s52 = sphi 0, %s36
      %s56 = sphi 0, %s56
      %s58 = sphi 0, %s56
      %s59 = sphi 0, %s58
      %s73 = sphi 0, %s59
      %s79 = sphi 0, %s81
      %s82 = sphi 0, %s79
      %s83 = sphi 0, %s82
      %s99 = sphi 0, %s83
      %s105 = sphi 0, %s107
      %s108 = sphi 0, %s105
      %s109 = sphi 0, %s108
      %s125 = sphi 0, %s109
      %s131 = sphi 0, %s133
      %s134 = sphi 0, %s131
      %s135 = sphi 0, %s134
      %s151 = sphi 0, %s135
      %s157 = sphi 0, %s159
      %s160 = sphi 0, %s157
      %s161 = sphi 0, %s160
      %s177 = sphi 0, %s161
    $region4: #{bilinear_attention.1} parent=1 // loop_header_branch
      %25 = sbr.rel (%p23) target = $region8
    $region5: #{bilinear_attention.1} parent=1 // loop_body
      %s27 = ssub.s32 %s22, 1
      %s28 = ssub.s32 %s22, 2
      %s29 = sadd.s32 %s22, 1
      %s30 = ssub.s32 %s22, %s29
      %p31 = scmp.eq.s32.totalorder %s30, 0
      %s33 = sadd.s32 %s32, 1
      %s34 = scalar_select %p31, %s32, %s33
      %p37 = pneg %p31
      %p38 = scmp.eq.s32.totalorder %s22, 3
      %p39 = por %p37, %p38
      %p40 = scmp.ne.s32.totalorder %s32, %s35
      %p41 = scmp.eq.s32.totalorder %s22, 0
      %p42 = por %p40, %p41
      %p43 = scmp.ne.s32.totalorder %s32, %s35
      %p44 = scmp.eq.s32.totalorder %s27, 3
      %p45 = por %p43, %p44
      %p46 = scmp.ne.s32.totalorder %s35, %s36
      %p47 = scmp.eq.s32.totalorder %s27, 0
      %p48 = por %p46, %p47
      %p49 = scmp.ne.s32.totalorder %s35, %s36
      %p50 = scmp.eq.s32.totalorder %s28, 3
      %p51 = por %p49, %p50
      %p53 = scmp.ne.s32.totalorder %s36, %s52
      %p54 = scmp.eq.s32.totalorder %s28, 0
      %p55 = por %p53, %p54
      %s57 = sadd.s32 %s56, 1
      %p60 = scmp.eq.s32.totalorder %s22, 3
      %p61 = scmp.ne.s32.totalorder %s56, %s58
      %p62 = scmp.eq.s32.totalorder %s22, 0
      %p63 = por %p61, %p62
      %p64 = scmp.ne.s32.totalorder %s56, %s58
      %p65 = scmp.eq.s32.totalorder %s27, 3
      %p66 = por %p64, %p65
      %p67 = scmp.ne.s32.totalorder %s58, %s59
      %p68 = scmp.eq.s32.totalorder %s27, 0
      %p69 = por %p67, %p68
      %p70 = scmp.ne.s32.totalorder %s58, %s59
      %p71 = scmp.eq.s32.totalorder %s28, 3
      %p72 = por %p70, %p71
      %p74 = scmp.ne.s32.totalorder %s59, %s73
      %p75 = scmp.eq.s32.totalorder %s28, 0
      %p76 = por %p74, %p75
      %s77 = ssub.s32 %s22, %s29
      %p78 = scmp.eq.s32.totalorder %s77, 0
      %s80 = sadd.s32 %s79, 1
      %s81 = scalar_select %p78, %s79, %s80
      %p84 = pneg %p78
      %p85 = scmp.eq.s32.totalorder %s22, 3
      %p86 = por %p84, %p85
      %p87 = scmp.ne.s32.totalorder %s79, %s82
      %p88 = scmp.eq.s32.totalorder %s22, 0
      %p89 = por %p87, %p88
      %p90 = scmp.ne.s32.totalorder %s79, %s82
      %p91 = scmp.eq.s32.totalorder %s27, 3
      %p92 = por %p90, %p91
      %p93 = scmp.ne.s32.totalorder %s82, %s83
      %p94 = scmp.eq.s32.totalorder %s27, 0
      %p95 = por %p93, %p94
      %p96 = scmp.ne.s32.totalorder %s82, %s83
      %p97 = scmp.eq.s32.totalorder %s28, 3
      %p98 = por %p96, %p97
      %p100 = scmp.ne.s32.totalorder %s83, %s99
      %p101 = scmp.eq.s32.totalorder %s28, 0
      %p102 = por %p100, %p101
      %s103 = ssub.s32 %s22, %s29
      %p104 = scmp.eq.s32.totalorder %s103, 0
      %s106 = sadd.s32 %s105, 1
      %s107 = scalar_select %p104, %s105, %s106
      %p110 = pneg %p104
      %p111 = scmp.eq.s32.totalorder %s22, 3
      %p112 = por %p110, %p111
      %p113 = scmp.ne.s32.totalorder %s105, %s108
      %p114 = scmp.eq.s32.totalorder %s22, 0
      %p115 = por %p113, %p114
      %p116 = scmp.ne.s32.totalorder %s105, %s108
      %p117 = scmp.eq.s32.totalorder %s27, 3
      %p118 = por %p116, %p117
      %p119 = scmp.ne.s32.totalorder %s108, %s109
      %p120 = scmp.eq.s32.totalorder %s27, 0
      %p121 = por %p119, %p120
      %p122 = scmp.ne.s32.totalorder %s108, %s109
      %p123 = scmp.eq.s32.totalorder %s28, 3
      %p124 = por %p122, %p123
      %p126 = scmp.ne.s32.totalorder %s109, %s125
      %p127 = scmp.eq.s32.totalorder %s28, 0
      %p128 = por %p126, %p127
      %s129 = ssub.s32 %s22, %s29
      %p130 = scmp.eq.s32.totalorder %s129, 0
      %s132 = sadd.s32 %s131, 1
      %s133 = scalar_select %p130, %s131, %s132
      %p136 = pneg %p130
      %p137 = scmp.eq.s32.totalorder %s22, 3
      %p138 = por %p136, %p137
      %p139 = scmp.ne.s32.totalorder %s131, %s134
      %p140 = scmp.eq.s32.totalorder %s22, 0
      %p141 = por %p139, %p140
      %p142 = scmp.ne.s32.totalorder %s131, %s134
      %p143 = scmp.eq.s32.totalorder %s27, 3
      %p144 = por %p142, %p143
      %p145 = scmp.ne.s32.totalorder %s134, %s135
      %p146 = scmp.eq.s32.totalorder %s27, 0
      %p147 = por %p145, %p146
      %p148 = scmp.ne.s32.totalorder %s134, %s135
      %p149 = scmp.eq.s32.totalorder %s28, 3
      %p150 = por %p148, %p149
      %p152 = scmp.ne.s32.totalorder %s135, %s151
      %p153 = scmp.eq.s32.totalorder %s28, 0
      %p154 = por %p152, %p153
      %s155 = ssub.s32 %s22, %s29
      %p156 = scmp.eq.s32.totalorder %s155, 0
      %s158 = sadd.s32 %s157, 1
      %s159 = scalar_select %p156, %s157, %s158
      %p162 = pneg %p156
      %p163 = scmp.eq.s32.totalorder %s22, 3
      %p164 = por %p162, %p163
      %p165 = scmp.ne.s32.totalorder %s157, %s160
      %p166 = scmp.eq.s32.totalorder %s22, 0
      %p167 = por %p165, %p166
      %p168 = scmp.ne.s32.totalorder %s157, %s160
      %p169 = scmp.eq.s32.totalorder %s27, 3
      %p170 = por %p168, %p169
      %p171 = scmp.ne.s32.totalorder %s160, %s161
      %p172 = scmp.eq.s32.totalorder %s27, 0
      %p173 = por %p171, %p172
      %p174 = scmp.ne.s32.totalorder %s160, %s161
      %p175 = scmp.eq.s32.totalorder %s28, 3
      %p176 = por %p174, %p175
      %p178 = scmp.ne.s32.totalorder %s161, %s177
      %p179 = scmp.eq.s32.totalorder %s28, 0
      %p180 = por %p178, %p179
      %p181 = scmp.le.s32.totalorder 1, %s22
      %p182 = scmp.lt.s32.totalorder %s22, 5
      %p183 = pnand %p181, %p182
      %p184 = pneg %p183
      // Predicated region
      $region9: #{bilinear_attention.1} parent=5 // pred_check
        _
      $region10: #{bilinear_attention.1} parent=5 // pred_check_branch
        %186 = sbr.rel (%p183) target = $region12
      $region11: #{bilinear_attention.1} parent=5 // pred_region
        %s187 = ssub.s32 %s22, 1
        // Predicated region
        $region13: #{bilinear_attention.1} parent=11 // pred_check
          %p188 = pneg %p69
        $region14: #{bilinear_attention.1} parent=11 // pred_check_branch
          %190 = sbr.rel (%p188) target = $region16
        $region15: #{bilinear_attention.1} parent=11 // pred_region
          %192 = vsyncadd [#allocation6], 0
          %s193 = sshll.u32 %s1, 4
          %s194 = int_to_ptr.hbm [resolvable:$true] %s193
          %s195 = sshll.u32 [#allocation5], 4
          %s196 = int_to_ptr.vmem [resolvable:$true] %s195
          %201 = dma.hbm_to_vmem [thread:$0]  %s194, 1024, %s196, [#allocation6], 128, 128, 8
        $region16: #{bilinear_attention.1} parent=11 // pred_fallthru
          _
      $region12: #{bilinear_attention.1} parent=5 // pred_fallthru
        _
      %p202 = scmp.lt.s32.totalorder %s22, 4
      // Predicated region
      $region17: #{bilinear_attention.1} parent=5 // pred_check
        %p203 = pneg %p202
      $region18: #{bilinear_attention.1} parent=5 // pred_check_branch
        %205 = sbr.rel (%p203) target = $region20
      $region19: #{bilinear_attention.1} parent=5 // pred_region
        // Predicated region
        $region21: #{bilinear_attention.1} parent=19 // pred_check
          %p206 = pneg %p42
        $region22: #{bilinear_attention.1} parent=19 // pred_check_branch
          %208 = sbr.rel (%p206) target = $region24
        $region23: #{bilinear_attention.1} parent=19 // pred_region
          %s209 = sand.u32 %s22, 1
          %s210 = scalar_lea.sflag [#allocation3], %s209
          %s211 = sand.u32 %s32, 1
          %s212 = scalar_lea.vmem [#allocation2], %s211
          %214 = vsyncadd %s210, 0
          %s215 = scalar_lea.hbm %s0, %s22
          %s217 = sshll.u32 %s215, 4
          %s218 = int_to_ptr.hbm [resolvable:$true] %s217
          %s219 = sshll.u32 %s212, 4
          %s220 = int_to_ptr.vmem [resolvable:$true] %s219
          %222 = dma.hbm_to_vmem [thread:$0]  %s218, 16, %s220, %s210
        $region24: #{bilinear_attention.1} parent=19 // pred_fallthru
          _
        // Predicated region
        $region25: #{bilinear_attention.1} parent=19 // pred_check
          %p223 = pneg %p89
        $region26: #{bilinear_attention.1} parent=19 // pred_check_branch
          %225 = sbr.rel (%p223) target = $region28
        $region27: #{bilinear_attention.1} parent=19 // pred_region
          %s226 = sand.u32 %s22, 1
          %s227 = scalar_lea.sflag [#allocation3], %s226
          %s228 = sand.u32 %s79, 1
          %s229 = smul.addr %s228, 16
          %s230 = scalar_lea.vmem [#allocation7], %s229
          %232 = vsyncadd %s227, 0
          %s233 = smul.addr %s22, 2
          %s234 = smul.addr %s233, 8
          %s235 = scalar_lea.hbm %s2, %s234
          %s236 = sshll.u32 %s235, 4
          %s237 = int_to_ptr.hbm [resolvable:$true] %s236
          %s238 = sshll.u32 %s230, 4
          %s239 = int_to_ptr.vmem [resolvable:$true] %s238
          %244 = dma.hbm_to_vmem [thread:$0]  %s237, 256, %s239, %s227, 128, 128, 8
        $region28: #{bilinear_attention.1} parent=19 // pred_fallthru
          _
        // Predicated region
        $region29: #{bilinear_attention.1} parent=19 // pred_check
          %p245 = pneg %p115
        $region30: #{bilinear_attention.1} parent=19 // pred_check_branch
          %247 = sbr.rel (%p245) target = $region32
        $region31: #{bilinear_attention.1} parent=19 // pred_region
          %p248 = scmp.lt.s32.totalorder %s22, 3
          %s249 = scalar_select %p248, %s22, 3
          %s250 = scalar_lea.vmem %s3, %s249
        $region32: #{bilinear_attention.1} parent=19 // pred_fallthru
          _
      $region20: #{bilinear_attention.1} parent=5 // pred_fallthru
        _
      %p251 = scmp.le.s32.totalorder 1, %s22
      %p252 = scmp.lt.s32.totalorder %s22, 5
      %p253 = pnand %p251, %p252
      %p254 = pneg %p253
      // Predicated region
      $region33: #{bilinear_attention.1} parent=5 // pred_check
        _
      $region34: #{bilinear_attention.1} parent=5 // pred_check_branch
        %256 = sbr.rel (%p253) target = $region36
      $region35: #{bilinear_attention.1} parent=5 // pred_region
        %s257 = ssub.s32 %s22, 1
        %s258 = sand.u32 %s27, 1
        %s259 = scalar_lea.sflag [#allocation3], %s258
        %s260 = sand.u32 %s35, 1
        %s261 = scalar_lea.vmem [#allocation2], %s260
        // Predicated region
        $region37: #{bilinear_attention.1} parent=35 // pred_check
          %p262 = pneg %p48
        $region38: #{bilinear_attention.1} parent=35 // pred_check_branch
          %264 = sbr.rel (%p262) target = $region40
        $region39: #{bilinear_attention.1} parent=35 // pred_region
          %266 = dma.done %s259, 16
        $region40: #{bilinear_attention.1} parent=35 // pred_fallthru
          _
        // Predicated region
        $region41: #{bilinear_attention.1} parent=35 // pred_check
          %p267 = pneg %p69
        $region42: #{bilinear_attention.1} parent=35 // pred_check_branch
          %269 = sbr.rel (%p267) target = $region44
        $region43: #{bilinear_attention.1} parent=35 // pred_region
          %271 = dma.done [#allocation6], 1024
        $region44: #{bilinear_attention.1} parent=35 // pred_fallthru
          _
        %s272 = sand.u32 %s27, 1
        %s273 = scalar_lea.sflag [#allocation3], %s272
        %s274 = sand.u32 %s82, 1
        %s275 = smul.addr %s274, 16
        %s276 = scalar_lea.vmem [#allocation7], %s275
        // Predicated region
        $region45: #{bilinear_attention.1} parent=35 // pred_check
          %p277 = pneg %p95
        $region46: #{bilinear_attention.1} parent=35 // pred_check_branch
          %279 = sbr.rel (%p277) target = $region48
        $region47: #{bilinear_attention.1} parent=35 // pred_region
          %281 = dma.done %s273, 256
        $region48: #{bilinear_attention.1} parent=35 // pred_fallthru
          _
        %s282 = sand.u32 %s27, 1
        %s283 = scalar_lea.sflag [#allocation3], %s282
        %s284 = sand.u32 %s35, 1
        %s285 = scalar_lea.vmem [#allocation2], %s284
        %p286 = pneg %p48
        %p287 = pneg %p45
        %p288 = pneg %p69
        %p289 = pneg %p66
        %s290 = sand.u32 %s27, 1
        %s291 = scalar_lea.sflag [#allocation3], %s290
        %s292 = sand.u32 %s82, 1
        %s293 = smul.addr %s292, 16
        %s294 = scalar_lea.vmem [#allocation7], %s293
        %p295 = pneg %p95
        %p296 = pneg %p92
        %p297 = scmp.lt.s32.totalorder %s27, 3
        %s298 = scalar_select %p297, %s27, 3
        %s299 = scalar_lea.vmem %s3, %s298
        %p300 = pneg %p121
        %p301 = pneg %p118
        %p302 = pneg %p147
        %p303 = pneg %p144
        %s304 = sand.u32 %s134, 1
        %s305 = scalar_lea.sflag [#allocation4], %s304
        %s306 = sand.u32 %s134, 1
        %s307 = scalar_lea.vmem [#allocation8], %s306
        %p308 = pneg %p173
        %p309 = pneg %p170
        %s310 = sand.u32 %s160, 1
        %s311 = scalar_lea.sflag [#allocation10], %s310
        %s312 = sand.u32 %s160, 1
        %s313 = scalar_lea.vmem [#allocation9], %s312
        %p314 = scmp.lt.s32.totalorder %s27, 3
        %s315 = scalar_select %p314, %s27, 3
        %s316 = scalar_lea.vmem %s3, %s315
        %v317 = vld [vmem:[%s261] sm:$0x1]
        %v318 = vld [vmem:[#allocation5] sm:$0xff]
        %v319 = vld [vmem:[#allocation5 + $0x8] sm:$0xff]
        %v320 = vld [vmem:[#allocation5 + $0x10] sm:$0xff]
        %v321 = vld [vmem:[#allocation5 + $0x18] sm:$0xff]
        %v322 = vld [vmem:[#allocation5 + $0x20] sm:$0xff]
        %v323 = vld [vmem:[#allocation5 + $0x28] sm:$0xff]
        %v324 = vld [vmem:[#allocation5 + $0x30] sm:$0xff]
        %v325 = vld [vmem:[#allocation5 + $0x38] sm:$0xff]
        %v326 = vld [vmem:[%s276] sm:$0xff]
        %v327 = vld [vmem:[%s276 + $0x8] sm:$0xff]
        %vm328 = vcmask 523264
        %v330 = vsel %vm328, %v317, 0
        %332 = vmatpush.msra.mxu0 0.0
        %333 = vmatpush.msra.mxu0 0.0
        %334 = vmatpush.msra.mxu0 0.0
        %335 = vmatpush.msra.mxu0 0.0
        %336 = vmatpush.msra.mxu0 0.0
        %337 = vmatpush.msra.mxu0 0.0
        %338 = vmatpush.msra.mxu0 0.0
        %339 = vmatpush.msra.mxu0 0.0
        %340 = vmatpush.msra.mxu0 %v325
        %341 = vmatpush.msra.mxu0 %v324
        %342 = vmatpush.msra.mxu0 %v323
        %343 = vmatpush.msra.mxu0 %v322
        %344 = vmatpush.msra.mxu0 %v321
        %345 = vmatpush.msra.mxu0 %v320
        %346 = vmatpush.msra.mxu0 %v319
        %347 = vmatpush.msra.mxu0 %v318
        %348 = vmatmul.f32.gmra.mxu0 %v330
        %v349 = vpop.f32.mrf.mxu0
        %v350 = vadd.f32 0.0, %v349
        %351 = vdwg.mxu0
        %352 = vmatpush.xpose.msra.mxu0 0.0
        %353 = vmatpush.xpose.msra.mxu0 0.0
        %354 = vmatpush.xpose.msra.mxu0 0.0
        %355 = vmatpush.xpose.msra.mxu0 0.0
        %356 = vmatpush.xpose.msra.mxu0 0.0
        %357 = vmatpush.xpose.msra.mxu0 0.0
        %358 = vmatpush.xpose.msra.mxu0 0.0
        %359 = vmatpush.xpose.msra.mxu0 0.0
        %360 = vmatpush.xpose.msra.mxu0 0.0
        %361 = vmatpush.xpose.msra.mxu0 0.0
        %362 = vmatpush.xpose.msra.mxu0 0.0
        %363 = vmatpush.xpose.msra.mxu0 0.0
        %364 = vmatpush.xpose.msra.mxu0 0.0
        %365 = vmatpush.xpose.msra.mxu0 0.0
        %366 = vmatpush.xpose.msra.mxu0 %v327
        %367 = vmatpush.xpose.msra.mxu0 %v326
        %368 = vmatmul.f32.gmra.mxu0 %v350
        %v369 = vpop.f32.mrf.mxu0
        %v370 = vadd.f32 0.0, %v369
        %371 = vdwg.mxu0
        %vm372 = vcmask 122880
        %v373 = vsel %vm372, %v370, -inf
        %374 = vmax.xlane.f32.xlu0 %v373
        %v375 = vpop.xlane.xlu0 %374
        %v376 = vsub.f32 %v370, %v375
        %v377 = vmul.f32 %v376, 1.442695
        %v378 = vpow.pop %v377
        %v379 = vsel %vm372, %v378, 0.0
        %380 = vadd.xlane.f32.xlu0 %v379
        %v381 = vpop.xlane.xlu0 %380
        %v382 = vrcp.pop %v381
        %v383 = vmul.f32 %v381, %v382
        %v384 = vsub.f32 1.0, %v383
        %v385 = vmul.f32 %v382, %v384
        %v386 = vadd.f32 %v382, %v385
        %vm387 = vweird.f32 %v381
        %vm388 = vweird.f32 %v382
        %vm389 = vmor %vm387, %vm388
        %v390 = vsel %vm389, %v382, %v386
        %v391 = vand.u32 2147483647, %v381
        %vm392 = vcmp.eq.f32.partialorder %v391, 8.507059e+37
        %v393 = vand.u32 %v381, 2147483648
        %v394 = vor.u32 1.1754944e-38, %v393
        %v395 = vsel %vm392, %v394, %v390
        %v396 = vmul.f32 %v378, %v395
        %v397 = vld [vmem:[%s316] sm:$0x1]
        %v398 = vmul.f32 %v396, %v397
        %v399 = vsel %vm372, %v398, 0.0
        %400 = vadd.xlane.f32.xlu0 %v399
        %v401 = vpop.xlane.xlu0 %400
        %v402 = vrcp.pop %v401
        %v403 = vmul.f32 %v401, %v402
        %v404 = vsub.f32 1.0, %v403
        %v405 = vmul.f32 %v402, %v404
        %v406 = vadd.f32 %v402, %v405
        %vm407 = vweird.f32 %v401
        %vm408 = vweird.f32 %v402
        %vm409 = vmor %vm407, %vm408
        %v410 = vsel %vm409, %v402, %v406
        %v411 = vand.u32 2147483647, %v401
        %vm412 = vcmp.eq.f32.partialorder %v411, 8.507059e+37
        %v413 = vand.u32 %v401, 2147483648
        %v414 = vor.u32 1.1754944e-38, %v413
        %v415 = vsel %vm412, %v414, %v410
        %v416 = vmul.f32 %v398, %v415
        %vm417 = vcmask 130048
        %v419 = vsel %vm417, %v416, 0
        %421 = vmatpush.msra.mxu0 0.0
        %422 = vmatpush.msra.mxu0 0.0
        %423 = vmatpush.msra.mxu0 0.0
        %424 = vmatpush.msra.mxu0 0.0
        %425 = vmatpush.msra.mxu0 0.0
        %426 = vmatpush.msra.mxu0 0.0
        %427 = vmatpush.msra.mxu0 0.0
        %428 = vmatpush.msra.mxu0 0.0
        %429 = vmatpush.msra.mxu0 0.0
        %430 = vmatpush.msra.mxu0 0.0
        %431 = vmatpush.msra.mxu0 0.0
        %432 = vmatpush.msra.mxu0 0.0
        %433 = vmatpush.msra.mxu0 0.0
        %434 = vmatpush.msra.mxu0 0.0
        %435 = vmatpush.msra.mxu0 %v327
        %436 = vmatpush.msra.mxu0 %v326
        %437 = vmatmul.f32.gmra.mxu0 %v419
        %v438 = vpop.f32.mrf.mxu0
        %v439 = vadd.f32 0.0, %v438
        %440 = vdwg.mxu0
        %441 = vst [vmem:[%s307] sm:$0x1] %v439
        %442 = vst.msk [vmem:[%s313] sm:$0x1] %vm372, %v416
        %s443 = sand.u32 %s134, 1
        %s444 = scalar_lea.sflag [#allocation4], %s443
        %s445 = sand.u32 %s134, 1
        %s446 = scalar_lea.vmem [#allocation8], %s445
        %s447 = sand.u32 %s160, 1
        %s448 = scalar_lea.sflag [#allocation10], %s447
        %s449 = sand.u32 %s160, 1
        %s450 = scalar_lea.vmem [#allocation9], %s449
        // Predicated region
        $region49: #{bilinear_attention.1} parent=35 // pred_check
          %p451 = pneg %p144
        $region50: #{bilinear_attention.1} parent=35 // pred_check_branch
          %453 = sbr.rel (%p451) target = $region52
        $region51: #{bilinear_attention.1} parent=35 // pred_region
          %455 = vsyncadd %s444, 0
          %s456 = scalar_lea.hbm %s4, %s27
          %s458 = sshll.u32 %s446, 4
          %s459 = int_to_ptr.vmem [resolvable:$true] %s458
          %s460 = sshll.u32 %s456, 4
          %s461 = int_to_ptr.hbm [resolvable:$true] %s460
          %463 = dma.vmem_to_hbm [thread:$0]  %s459, 16, %s461, %s444
        $region52: #{bilinear_attention.1} parent=35 // pred_fallthru
          _
        // Predicated region
        $region53: #{bilinear_attention.1} parent=35 // pred_check
          %p464 = pneg %p170
        $region54: #{bilinear_attention.1} parent=35 // pred_check_branch
          %466 = sbr.rel (%p464) target = $region56
        $region55: #{bilinear_attention.1} parent=35 // pred_region
          %468 = vsyncadd %s448, 0
          %s469 = scalar_lea.hbm %s5, %s27
          %s471 = sshll.u32 %s450, 4
          %s472 = int_to_ptr.vmem [resolvable:$true] %s471
          %s473 = sshll.u32 %s469, 4
          %s474 = int_to_ptr.hbm [resolvable:$true] %s473
          %476 = dma.vmem_to_hbm [thread:$0]  %s472, 16, %s474, %s448
        $region56: #{bilinear_attention.1} parent=35 // pred_fallthru
          _
      $region36: #{bilinear_attention.1} parent=5 // pred_fallthru
        _
      %p477 = scmp.le.s32.totalorder 2, %s22
      // Predicated region
      $region57: #{bilinear_attention.1} parent=5 // pred_check
        %p478 = pneg %p477
      $region58: #{bilinear_attention.1} parent=5 // pred_check_branch
        %480 = sbr.rel (%p478) target = $region60
      $region59: #{bilinear_attention.1} parent=5 // pred_region
        %s481 = ssub.s32 %s22, 2
        // Predicated region
        $region61: #{bilinear_attention.1} parent=59 // pred_check
          %p482 = pneg %p150
        $region62: #{bilinear_attention.1} parent=59 // pred_check_branch
          %484 = sbr.rel (%p482) target = $region64
        $region63: #{bilinear_attention.1} parent=59 // pred_region
          %s485 = sand.u32 %s135, 1
          %s486 = scalar_lea.sflag [#allocation4], %s485
          %s487 = sand.u32 %s135, 1
          %s488 = scalar_lea.vmem [#allocation8], %s487
          %490 = dma.done %s486, 16
        $region64: #{bilinear_attention.1} parent=59 // pred_fallthru
          _
        // Predicated region
        $region65: #{bilinear_attention.1} parent=59 // pred_check
          %p491 = pneg %p176
        $region66: #{bilinear_attention.1} parent=59 // pred_check_branch
          %493 = sbr.rel (%p491) target = $region68
        $region67: #{bilinear_attention.1} parent=59 // pred_region
          %s494 = sand.u32 %s161, 1
          %s495 = scalar_lea.sflag [#allocation10], %s494
          %s496 = sand.u32 %s161, 1
          %s497 = scalar_lea.vmem [#allocation9], %s496
          %499 = dma.done %s495, 16
        $region68: #{bilinear_attention.1} parent=59 // pred_fallthru
          _
      $region60: #{bilinear_attention.1} parent=5 // pred_fallthru
        _
    $region6: #{bilinear_attention.1} parent=1 // loop_footer
      %s26 = sadd.s32 1, %s22
    $region7: #{bilinear_attention.1} parent=1 // loop_footer_branch
      %21 = sbr.rel target = $region3
    $region8: #{bilinear_attention.1} parent=1 // loop_exit
      _
    %500 = vsyncpa [#allocation3], 1
    %s501 = scalar_lea.sflag [#allocation3], 1
    %502 = vsyncpa %s501, 1
    %503 = vsyncpa [#allocation6], 1
    %504 = vsyncpa [#allocation4], 1
    %s505 = scalar_lea.sflag [#allocation4], 1
    %506 = vsyncpa %s505, 1
    %507 = vsyncpa [#allocation10], 1
    %s508 = scalar_lea.sflag [#allocation10], 1
    %509 = vsyncpa %s508, 1

</llo_original>
